<compile_context>
chip_gen: v6e
topology: v6e:2x2x1
jax: 0.10.0
libtpu: 0.0.40
codegen_flags: <defaults>
</compile_context>

<pallas_src>
import functools

import jax
import jax.numpy as jnp
from jax.experimental import pallas as pl
from jax.experimental.pallas import tpu as pltpu


def _focal_loss_kernel(*refs, gamma, n_total, tile_n, has_alpha):
    if has_alpha:
        pred_ref, labels_ref, alpha_ref, out_ref = refs
    else:
        pred_ref, labels_ref, out_ref = refs
        alpha_ref = None

    logits = pred_ref[...].astype(jnp.float32)   # (tile_n, C) f32 in-kernel
    labels = labels_ref[...]                     # (tile_n, 1) int32
    tn, c = logits.shape

    # Numerically stable log-softmax pieces (only lse needs a full-tile exp).
    m = jnp.max(logits, axis=1, keepdims=True)                        # (tn, 1)
    shifted = logits - m                                              # (tn, C)
    lse = jnp.log(jnp.sum(jnp.exp(shifted), axis=1, keepdims=True))   # (tn, 1)

    # one_hot(true) via lane-iota compare; gather the true-class shifted logit.
    col = jax.lax.broadcasted_iota(jnp.int32, (tn, c), 1)
    one_hot = (col == labels).astype(jnp.float32)                     # (tn, C)
    shifted_true = jnp.sum(one_hot * shifted, axis=1, keepdims=True)  # (tn, 1)

    log_p_true = shifted_true - lse                                   # (tn, 1)
    p_true = jnp.exp(log_p_true)                                      # (tn, 1)

    if has_alpha:
        alpha_per = jnp.sum(one_hot * alpha_ref[...], axis=1, keepdims=True)
    else:
        alpha_per = jnp.float32(1.0)

    # Clamp to avoid (1 - p) < 0 by an ulp (NaN under non-integer pow).
    one_minus_p = jnp.maximum(1.0 - p_true, 0.0)

    g_int = int(gamma)
    if float(gamma) == float(g_int) and 0 <= g_int <= 8:
        # Integer gamma (default 2.0): plain VPU multiplies, no EUP pow.
        focal = jnp.ones_like(one_minus_p)
        for _ in range(g_int):
            focal = focal * one_minus_p
    else:
        focal = one_minus_p ** jnp.float32(gamma)

    per_row = -alpha_per * focal * log_p_true                         # (tn, 1)

    # Mask rows past the true batch size (only needed for a partial last tile).
    if n_total % tile_n != 0:
        row_ids = (jax.lax.broadcasted_iota(jnp.int32, (tn, 1), 0)
                   + pl.program_id(0) * tile_n)
        per_row = jnp.where(row_ids < n_total, per_row, jnp.float32(0.0))

    partial = jnp.sum(per_row)
    # Lane-dense (1, 8, 128) output block; wrapper reads [:, 0, 0].
    out_ref[...] = jnp.full(out_ref.shape, partial, dtype=jnp.float32)


def _choose_tile_n(n, c, itemsize):
    # Keep a double-buffered pred tile well inside the default scoped VMEM on
    # every generation (v7x: 64 MiB physical / 32 MiB scoped is the tightest).
    budget_bytes = 4 * 1024 * 1024            # per in-flight pred buffer
    tile = budget_bytes // max(1, c * itemsize)
    tile = max(8, (tile // 8) * 8)            # sublane-aligned when tiling
    tile = min(tile, 2048)                    # amortize ~0.35us/step overhead
    if tile >= n:
        return n                              # single full block (any N is ok)
    return tile


def focal_loss(pred, true, gamma=2.0, alpha=None, reduction="mean", *, tile_n=None):
    """Pallas TPU implementation of FocalLoss.forward.

    pred: (N, C) logits (any float dtype; cast to f32 inside the kernel),
    true: (N,) int labels, alpha: optional (C,) per-class weights.
    Returns a scalar float32.
    """
    n, c = pred.shape
    labels_2d = true.astype(jnp.int32).reshape(n, 1)

    if tile_n is None:
        tile_n = _choose_tile_n(n, c, jnp.dtype(pred.dtype).itemsize)
    tile_n = min(tile_n, n)                   # if < n it must be a multiple of 8
    num_tiles = pl.cdiv(n, tile_n)

    in_specs = [
        pl.BlockSpec((tile_n, c), lambda i: (i, 0)),   # logits tile
        pl.BlockSpec((tile_n, 1), lambda i: (i, 0)),   # labels tile
    ]
    operands = [pred, labels_2d]
    has_alpha = alpha is not None
    if has_alpha:
        alpha_vec = jnp.asarray(alpha, dtype=jnp.float32).reshape(1, c)
        in_specs.append(pl.BlockSpec((1, c), lambda i: (0, 0)))  # untiled
        operands.append(alpha_vec)

    kernel = functools.partial(
        _focal_loss_kernel,
        gamma=float(gamma),
        n_total=n,
        tile_n=tile_n,
        has_alpha=has_alpha,
    )

    partials = pl.pallas_call(
        kernel,
        out_shape=jax.ShapeDtypeStruct((num_tiles, 8, 128), jnp.float32),
        grid=(num_tiles,),
        in_specs=in_specs,
        out_specs=pl.BlockSpec((1, 8, 128), lambda i: (i, 0, 0)),
        compiler_params=pltpu.CompilerParams(
            dimension_semantics=("parallel",)),
    )(*operands)

    total = jnp.sum(partials[:, 0, 0])
    if reduction == "mean":
        return total / jnp.float32(n)
    return total


def _focal_loss_ref(pred, true, gamma=2.0, alpha=None, reduction="mean"):
    # pure-JAX reference for sanity checking
    log_prob = jax.nn.log_softmax(pred.astype(jnp.float32), axis=1)
    prob = jnp.exp(log_prob)
    one_hot = jax.nn.one_hot(true, pred.shape[1], dtype=jnp.float32)
    a = 1.0 if alpha is None else jnp.asarray(alpha, jnp.float32)[true][:, None]
    loss = -a * (1.0 - prob) ** gamma * log_prob
    loss = jnp.sum(loss * one_hot, axis=1)
    return jnp.mean(loss) if reduction == "mean" else jnp.sum(loss)


if __name__ == "__main__":
    key = jax.random.PRNGKey(0)
    k1, k2 = jax.random.split(key)
    N, C = 37, 10  # small batch, 10 rock classes; N chosen to force a partial tile
    pred = jax.random.normal(k1, (N, C), dtype=jnp.float32) * 3.0
    true = jax.random.randint(k2, (N,), 0, C, dtype=jnp.int32)

    # Multi-tile path: tile_n=16 -> grid of 3 tiles, last tile masked (37 = 16+16+5).
    out = focal_loss(pred, true, gamma=2.0, alpha=None, reduction="mean", tile_n=16)
    out = jax.block_until_ready(out)
    ref = _focal_loss_ref(pred, true, gamma=2.0, alpha=None, reduction="mean")
    assert jnp.allclose(out, ref, atol=1e-5, rtol=1e-5), (out, ref)

    # Alpha + sum reduction, auto tile (single full block).
    alpha = jnp.linspace(0.5, 1.5, C, dtype=jnp.float32)
    out2 = focal_loss(pred, true, gamma=2.0, alpha=alpha, reduction="sum")
    out2 = jax.block_until_ready(out2)
    ref2 = _focal_loss_ref(pred, true, gamma=2.0, alpha=alpha, reduction="sum")
    assert jnp.allclose(out2, ref2, atol=1e-4, rtol=1e-5), (out2, ref2)

    print("KERNEL_OK")
</pallas_src>

<mosaic_0001>
module attributes {stable_mosaic.version = 11 : i64} {
  func.func @_focal_loss_kernel(%arg0: i32, %arg1: memref<16x10xf32, #tpu.memory_space<vmem>>, %arg2: memref<16x1xi32, #tpu.memory_space<vmem>>, %arg3: memref<1x8x128xf32, #tpu.memory_space<vmem>>) attributes {dimension_semantics = [#tpu.dimension_semantics<parallel>], iteration_bounds = array<i64: 3>, scalar_prefetch = 0 : i64, scratch_operands = 0 : i64, tpu.core_type = #tpu.core_type<tc>, window_params = [{transform_indices = @transform_0, window_bounds = array<i64: 16, 10>}, {transform_indices = @transform_1, window_bounds = array<i64: 16, 1>}, {transform_indices = @transform_2, window_bounds = array<i64: 1, 8, 128>}]} {
    %c0 = arith.constant 0 : index
    %c0_0 = arith.constant 0 : index
    %0 = vector.load %arg1[%c0, %c0_0] : memref<16x10xf32, #tpu.memory_space<vmem>>, vector<16x10xf32>
    %c0_1 = arith.constant 0 : index
    %c0_2 = arith.constant 0 : index
    %1 = vector.load %arg2[%c0_1, %c0_2] : memref<16x1xi32, #tpu.memory_space<vmem>>, vector<16x1xi32>
    %cst = arith.constant dense<0xFF800000> : vector<16xf32>
    %2 = vector.multi_reduction <maximumf>, %0, %cst [1] : vector<16x10xf32> to vector<16xf32>
    %3 = vector.shape_cast %2 : vector<16xf32> to vector<16x1xf32>
    %4 = vector.broadcast %3 : vector<16x1xf32> to vector<16x10xf32>
    %5 = arith.subf %0, %4 : vector<16x10xf32>
    %6 = math.exp %5 : vector<16x10xf32>
    %cst_3 = arith.constant dense<0.000000e+00> : vector<16xf32>
    %7 = vector.multi_reduction <add>, %6, %cst_3 [1] : vector<16x10xf32> to vector<16xf32>
    %8 = vector.shape_cast %7 : vector<16xf32> to vector<16x1xf32>
    %9 = math.log %8 : vector<16x1xf32>
    %10 = tpu.iota {dimensions = array<i32: 1>} : vector<16x10xi32>
    %11 = vector.broadcast %1 : vector<16x1xi32> to vector<16x10xi32>
    %12 = arith.cmpi eq, %10, %11 : vector<16x10xi32>
    %13 = arith.extui %12 : vector<16x10xi1> to vector<16x10xi32>
    %14 = arith.sitofp %13 : vector<16x10xi32> to vector<16x10xf32>
    %15 = arith.mulf %14, %5 : vector<16x10xf32>
    %cst_4 = arith.constant dense<0.000000e+00> : vector<16xf32>
    %16 = vector.multi_reduction <add>, %15, %cst_4 [1] : vector<16x10xf32> to vector<16xf32>
    %17 = vector.shape_cast %16 : vector<16xf32> to vector<16x1xf32>
    %18 = arith.subf %17, %9 : vector<16x1xf32>
    %19 = math.exp %18 : vector<16x1xf32>
    %cst_5 = arith.constant 1.000000e+00 : f32
    %20 = vector.broadcast %cst_5 : f32 to vector<16x1xf32>
    %21 = arith.subf %20, %19 : vector<16x1xf32>
    %cst_6 = arith.constant 0.000000e+00 : f32
    %22 = vector.broadcast %cst_6 : f32 to vector<16x1xf32>
    %23 = arith.maximumf %21, %22 : vector<16x1xf32>
    %cst_7 = arith.constant 1.000000e+00 : f32
    %24 = vector.broadcast %cst_7 : f32 to vector<16x1xf32>
    %25 = arith.mulf %24, %23 : vector<16x1xf32>
    %26 = arith.mulf %25, %23 : vector<16x1xf32>
    %cst_8 = arith.constant 0.000000e+00 : f32
    %cst_9 = arith.constant 1.000000e+00 : f32
    %27 = arith.subf %cst_8, %cst_9 : f32
    %28 = vector.broadcast %27 : f32 to vector<16x1xf32>
    %29 = arith.mulf %28, %26 : vector<16x1xf32>
    %30 = arith.mulf %29, %18 : vector<16x1xf32>
    %31 = tpu.iota {dimensions = array<i32: 0>} : vector<16x1xi32>
    %c16_i32 = arith.constant 16 : i32
    %32 = arith.muli %arg0, %c16_i32 : i32
    %33 = vector.broadcast %32 : i32 to vector<16x1xi32>
    %34 = arith.addi %31, %33 : vector<16x1xi32>
    %c37_i32 = arith.constant 37 : i32
    %35 = vector.broadcast %c37_i32 : i32 to vector<16x1xi32>
    %36 = arith.cmpi slt, %34, %35 : vector<16x1xi32>
    %cst_10 = arith.constant 0.000000e+00 : f32
    %37 = vector.broadcast %cst_10 : f32 to vector<16x1xf32>
    %38 = arith.select %36, %30, %37 : vector<16x1xi1>, vector<16x1xf32>
    %39 = vector.shape_cast %38 : vector<16x1xf32> to vector<1x16x1xf32>
    %cst_11 = arith.constant dense<0.000000e+00> : vector<1xf32>
    %40 = vector.multi_reduction <add>, %39, %cst_11 [1, 2] : vector<1x16x1xf32> to vector<1xf32>
    %41 = vector.shape_cast %40 : vector<1xf32> to vector<1x1x1xf32>
    %42 = vector.extract %41[0, 0, 0] : f32 from vector<1x1x1xf32>
    %43 = vector.broadcast %42 : f32 to vector<1x8x128xf32>
    %c0_12 = arith.constant 0 : index
    %c0_13 = arith.constant 0 : index
    %c0_14 = arith.constant 0 : index
    %44 = vector.load %arg3[%c0_12, %c0_13, %c0_14] : memref<1x8x128xf32, #tpu.memory_space<vmem>>, vector<1x8x128xf32>
    tpu.vector_store %arg3[%c0_12, %c0_13, %c0_14], %43 {strides = array<i32>} : memref<1x8x128xf32, #tpu.memory_space<vmem>>, vector<1x8x128xf32>,
    return
  }
  func.func @transform_0(%arg0: i32) -> (i32, i32) {
    %c0_i32 = arith.constant 0 : i32
    %c0_i32_0 = arith.constant 0 : i32
    return %arg0, %c0_i32 : i32, i32
  }
  func.func @transform_1(%arg0: i32) -> (i32, i32) {
    %c0_i32 = arith.constant 0 : i32
    %c0_i32_0 = arith.constant 0 : i32
    return %arg0, %c0_i32 : i32, i32
  }
  func.func @transform_2(%arg0: i32) -> (i32, i32, i32) {
    %c0_i32 = arith.constant 0 : i32
    %c0_i32_0 = arith.constant 0 : i32
    %c0_i32_1 = arith.constant 0 : i32
    return %arg0, %c0_i32, %c0_i32_0 : i32, i32, i32
  }
}

</mosaic_0001>

<llo_original>
// kernel: tpu_custom_call.1
$region0: #{tpu_custom_call.1}
  #allocation0 [shape = 'u32[]', space=smem, size = 0x4, offset = 0x4, fixed_abs, tag = 'smem constant byte address 0x4 - core index']
  #allocation1 [shape = 'u32[144,128]{1,0:T(1,128)}', space=vmem, size = 0x12000, scoped, tag = 'internal scratch']
  %s0 = inlined_call_operand.vmem [shape: f32[37,10], index: 0, kind: input, shape index: {}]
  %s1 = inlined_call_operand.vmem [shape: s32[37,1], index: 1, kind: input, shape index: {}]
  %s2 = inlined_call_operand.hbm [shape: f32[3,8,128], index: 2, kind: output, shape index: {}]
  %s3 = sld [smem:[#allocation0]]
  $region41: #{tpu_custom_call.1} parent=0
    _
  %s5 = ssub.s32 1, %s3
  %s6 = scalar_select 0, %s5, %s3
  $region1: #{tpu_custom_call.1} parent=0
    #allocation2 [shape = 'u8[8192]{0}', space=vmem, size = 0x2000, scoped, tag = 'output window, operand 0']
    #allocation3 [shape = 's32[2]{0}', space=sflag, size = 0x8, scoped, tag = 'scoped memory for tpu_custom_call.1']
    %7 = vsyncpa [#allocation3], 0
    %s8 = scalar_lea.sflag [#allocation3], 1
    %9 = vsyncpa %s8, 0
    loop: start=0, step=1, limit=5
    $region2: #{tpu_custom_call.1} parent=1 // loop_pre_header
      _
    $region3: #{tpu_custom_call.1} parent=1 // loop_header
      %s11 = sphi 0, %s15
      %p12 = scmp.ge.s32.totalorder %s11, 5
      %s21 = sphi 0, %s23
      %s24 = sphi 0, %s21
      %s25 = sphi 0, %s24
      %s41 = sphi 0, %s25
      %s47 = sphi 0, %s49
      %s50 = sphi 0, %s47
      %s51 = sphi 0, %s50
      %s67 = sphi 0, %s51
      %s73 = sphi 0, %s75
      %s76 = sphi 0, %s73
      %s77 = sphi 0, %s76
      %s93 = sphi 0, %s77
    $region4: #{tpu_custom_call.1} parent=1 // loop_header_branch
      %14 = sbr.rel (%p12) target = $region8
    $region5: #{tpu_custom_call.1} parent=1 // loop_body
      %s16 = ssub.s32 %s11, 1
      %s17 = ssub.s32 %s11, 2
      %s18 = sadd.s32 %s11, 1
      %s19 = ssub.s32 %s11, %s18
      %p20 = scmp.eq.s32.totalorder %s19, 0
      %s22 = sadd.s32 %s21, 1
      %s23 = scalar_select %p20, %s21, %s22
      %p26 = pneg %p20
      %p27 = scmp.eq.s32.totalorder %s11, 2
      %p28 = por %p26, %p27
      %p29 = scmp.ne.s32.totalorder %s21, %s24
      %p30 = scmp.eq.s32.totalorder %s11, 0
      %p31 = por %p29, %p30
      %p32 = scmp.ne.s32.totalorder %s21, %s24
      %p33 = scmp.eq.s32.totalorder %s16, 2
      %p34 = por %p32, %p33
      %p35 = scmp.ne.s32.totalorder %s24, %s25
      %p36 = scmp.eq.s32.totalorder %s16, 0
      %p37 = por %p35, %p36
      %p38 = scmp.ne.s32.totalorder %s24, %s25
      %p39 = scmp.eq.s32.totalorder %s17, 2
      %p40 = por %p38, %p39
      %p42 = scmp.ne.s32.totalorder %s25, %s41
      %p43 = scmp.eq.s32.totalorder %s17, 0
      %p44 = por %p42, %p43
      %s45 = ssub.s32 %s11, %s18
      %p46 = scmp.eq.s32.totalorder %s45, 0
      %s48 = sadd.s32 %s47, 1
      %s49 = scalar_select %p46, %s47, %s48
      %p52 = pneg %p46
      %p53 = scmp.eq.s32.totalorder %s11, 2
      %p54 = por %p52, %p53
      %p55 = scmp.ne.s32.totalorder %s47, %s50
      %p56 = scmp.eq.s32.totalorder %s11, 0
      %p57 = por %p55, %p56
      %p58 = scmp.ne.s32.totalorder %s47, %s50
      %p59 = scmp.eq.s32.totalorder %s16, 2
      %p60 = por %p58, %p59
      %p61 = scmp.ne.s32.totalorder %s50, %s51
      %p62 = scmp.eq.s32.totalorder %s16, 0
      %p63 = por %p61, %p62
      %p64 = scmp.ne.s32.totalorder %s50, %s51
      %p65 = scmp.eq.s32.totalorder %s17, 2
      %p66 = por %p64, %p65
      %p68 = scmp.ne.s32.totalorder %s51, %s67
      %p69 = scmp.eq.s32.totalorder %s17, 0
      %p70 = por %p68, %p69
      %s71 = ssub.s32 %s11, %s18
      %p72 = scmp.eq.s32.totalorder %s71, 0
      %s74 = sadd.s32 %s73, 1
      %s75 = scalar_select %p72, %s73, %s74
      %p78 = pneg %p72
      %p79 = scmp.eq.s32.totalorder %s11, 2
      %p80 = por %p78, %p79
      %p81 = scmp.ne.s32.totalorder %s73, %s76
      %p82 = scmp.eq.s32.totalorder %s11, 0
      %p83 = por %p81, %p82
      %p84 = scmp.ne.s32.totalorder %s73, %s76
      %p85 = scmp.eq.s32.totalorder %s16, 2
      %p86 = por %p84, %p85
      %p87 = scmp.ne.s32.totalorder %s76, %s77
      %p88 = scmp.eq.s32.totalorder %s16, 0
      %p89 = por %p87, %p88
      %p90 = scmp.ne.s32.totalorder %s76, %s77
      %p91 = scmp.eq.s32.totalorder %s17, 2
      %p92 = por %p90, %p91
      %p94 = scmp.ne.s32.totalorder %s77, %s93
      %p95 = scmp.eq.s32.totalorder %s17, 0
      %p96 = por %p94, %p95
      %p97 = scmp.le.s32.totalorder 1, %s11
      %p98 = scmp.lt.s32.totalorder %s11, 4
      %p99 = pnand %p97, %p98
      %p100 = pneg %p99
      // Predicated region
      $region9: #{tpu_custom_call.1} parent=5 // pred_check
        _
      $region10: #{tpu_custom_call.1} parent=5 // pred_check_branch
        %102 = sbr.rel (%p99) target = $region12
      $region11: #{tpu_custom_call.1} parent=5 // pred_region
        %s103 = ssub.s32 %s11, 1
      $region12: #{tpu_custom_call.1} parent=5 // pred_fallthru
        _
      %p104 = scmp.lt.s32.totalorder %s11, 3
      // Predicated region
      $region13: #{tpu_custom_call.1} parent=5 // pred_check
        %p105 = pneg %p104
      $region14: #{tpu_custom_call.1} parent=5 // pred_check_branch
        %107 = sbr.rel (%p105) target = $region16
      $region15: #{tpu_custom_call.1} parent=5 // pred_region
        // Predicated region
        $region17: #{tpu_custom_call.1} parent=15 // pred_check
          %p108 = pneg %p31
        $region18: #{tpu_custom_call.1} parent=15 // pred_check_branch
          %110 = sbr.rel (%p108) target = $region20
        $region19: #{tpu_custom_call.1} parent=15 // pred_region
          %s111 = smul.u32 2, %s11
          %s112 = ssub.s32 5, %s111
          %p113 = scmp.lt.s32.totalorder %s112, 2
          %s114 = scalar_select %p113, %s112, 2
          %s115 = smul.u32 128, %s114
          %p116 = scmp.lt.s32.totalorder %s111, 4
          %s117 = scalar_select %p116, %s111, 4
          %s118 = smul.addr %s117, 8
          %s119 = scalar_lea.vmem %s0, %s118
          %s120 = smul.u32 2, %s11
          %s121 = ssub.s32 5, %s120
          %p122 = scmp.lt.s32.totalorder %s121, 2
          %s123 = scalar_select %p122, %s121, 2
          %s124 = smul.u32 128, %s123
        $region20: #{tpu_custom_call.1} parent=15 // pred_fallthru
          _
        // Predicated region
        $region21: #{tpu_custom_call.1} parent=15 // pred_check
          %p125 = pneg %p57
        $region22: #{tpu_custom_call.1} parent=15 // pred_check_branch
          %127 = sbr.rel (%p125) target = $region24
        $region23: #{tpu_custom_call.1} parent=15 // pred_region
          %s128 = smul.u32 2, %s11
          %s129 = ssub.s32 5, %s128
          %p130 = scmp.lt.s32.totalorder %s129, 2
          %s131 = scalar_select %p130, %s129, 2
          %s132 = smul.u32 128, %s131
          %p133 = scmp.lt.s32.totalorder %s128, 4
          %s134 = scalar_select %p133, %s128, 4
          %s135 = smul.addr %s134, 8
          %s136 = scalar_lea.vmem %s1, %s135
          %s137 = smul.u32 2, %s11
          %s138 = ssub.s32 5, %s137
          %p139 = scmp.lt.s32.totalorder %s138, 2
          %s140 = scalar_select %p139, %s138, 2
          %s141 = smul.u32 128, %s140
        $region24: #{tpu_custom_call.1} parent=15 // pred_fallthru
          _
      $region16: #{tpu_custom_call.1} parent=5 // pred_fallthru
        _
      %p142 = scmp.le.s32.totalorder 1, %s11
      %p143 = scmp.lt.s32.totalorder %s11, 4
      %p144 = pnand %p142, %p143
      %p145 = pneg %p144
      // Predicated region
      $region25: #{tpu_custom_call.1} parent=5 // pred_check
        _
      $region26: #{tpu_custom_call.1} parent=5 // pred_check_branch
        %147 = sbr.rel (%p144) target = $region28
      $region27: #{tpu_custom_call.1} parent=5 // pred_region
        %s148 = ssub.s32 %s11, 1
        %s149 = smul.u32 2, %s16
        %s150 = ssub.s32 5, %s149
        %p151 = scmp.lt.s32.totalorder %s150, 2
        %s152 = scalar_select %p151, %s150, 2
        %s153 = smul.u32 128, %s152
        %p154 = scmp.lt.s32.totalorder %s149, 4
        %s155 = scalar_select %p154, %s149, 4
        %s156 = smul.addr %s155, 8
        %s157 = scalar_lea.vmem %s0, %s156
        %p158 = pneg %p37
        %p159 = pneg %p34
        %s160 = smul.u32 2, %s16
        %s161 = ssub.s32 5, %s160
        %p162 = scmp.lt.s32.totalorder %s161, 2
        %s163 = scalar_select %p162, %s161, 2
        %s164 = smul.u32 128, %s163
        %p165 = scmp.lt.s32.totalorder %s160, 4
        %s166 = scalar_select %p165, %s160, 4
        %s167 = smul.addr %s166, 8
        %s168 = scalar_lea.vmem %s1, %s167
        %p169 = pneg %p63
        %p170 = pneg %p60
        %p171 = pneg %p89
        %p172 = pneg %p86
        %s173 = sand.u32 %s76, 1
        %s174 = scalar_lea.sflag [#allocation3], %s173
        %s175 = sand.u32 %s76, 1
        %s176 = smul.addr %s175, 8
        %s177 = scalar_lea.vmem [#allocation2], %s176
        %s178 = smul.u32 2, %s16
        %s179 = ssub.s32 5, %s178
        %p180 = scmp.lt.s32.totalorder %s179, 2
        %s181 = scalar_select %p180, %s179, 2
        %s182 = smul.u32 128, %s181
        %p183 = scmp.lt.s32.totalorder %s178, 4
        %s184 = scalar_select %p183, %s178, 4
        %s185 = smul.addr %s184, 8
        %s186 = scalar_lea.vmem %s0, %s185
        %s187 = smul.u32 2, %s16
        %s188 = ssub.s32 5, %s187
        %p189 = scmp.lt.s32.totalorder %s188, 2
        %s190 = scalar_select %p189, %s188, 2
        %s191 = smul.u32 128, %s190
        %s192 = smul.u32 2, %s16
        %s193 = ssub.s32 5, %s192
        %p194 = scmp.lt.s32.totalorder %s193, 2
        %s195 = scalar_select %p194, %s193, 2
        %s196 = smul.u32 128, %s195
        %p197 = scmp.lt.s32.totalorder %s192, 4
        %s198 = scalar_select %p197, %s192, 4
        %s199 = smul.addr %s198, 8
        %s200 = scalar_lea.vmem %s1, %s199
        %s201 = smul.u32 2, %s16
        %s202 = ssub.s32 5, %s201
        %p203 = scmp.lt.s32.totalorder %s202, 2
        %s204 = scalar_select %p203, %s202, 2
        %s205 = smul.u32 128, %s204
        %v206 = vld [vmem:[%s186] sm:$0xff]
        %v207 = vld [vmem:[%s186 + $0x8] sm:$0xff]
        %v208 = vld [vmem:[%s200] sm:$0xff]
        %v209 = vld [vmem:[%s200 + $0x8] sm:$0xff]
        %vm210 = vcmask 80896
        %v211 = vsel %vm210, %v206, -inf
        %212 = vmax.xlane.f32.xlu0 %v211
        %v213 = vpop.xlane.xlu0 %212
        %v214 = vsel %vm210, %v207, -inf
        %215 = vmax.xlane.f32.xlu0 %v214
        %v216 = vpop.xlane.xlu0 %215
        %v217 = vsub.f32 %v206, %v213
        %v218 = vsub.f32 %v207, %v216
        %v219 = vmul.f32 %v217, 1.442695
        %v220 = vpow.pop %v219
        %v221 = vmul.f32 %v218, 1.442695
        %v222 = vpow.pop %v221
        %v223 = vsel %vm210, %v220, 0.0
        %224 = vadd.xlane.f32.xlu0 %v223
        %v225 = vpop.xlane.xlu0 %224
        %v226 = vsel %vm210, %v222, 0.0
        %227 = vadd.xlane.f32.xlu0 %v226
        %v228 = vpop.xlane.xlu0 %227
        %v229 = vlog2.pop %v225
        %v230 = vmul.f32 %v229, 0.6931472
        %v231 = vlog2.pop %v228
        %v232 = vmul.f32 %v231, 0.6931472
        %v233 = vlaneseq
        %v234 = vand.u32 %v233, 127
        %235 = vset.pattern.permute.xlu0 0
        %236 = vperm.xlu0 %235, %v208
        %v237 = vpop.permute.xlu0 %236
        %238 = vset.pattern.permute.xlu0 0
        %239 = vperm.xlu0 %238, %v209
        %v240 = vpop.permute.xlu0 %239
        %vm241 = vcmp.eq.s32.totalorder %v234, %v237
        %vm242 = vcmp.eq.s32.totalorder %v234, %v240
        %v243 = vsel %vm241, 1, 0
        %v244 = vsel %vm242, 1, 0
        %v245 = vcvt.s32.f32 %v243
        %v246 = vcvt.s32.f32 %v244
        %v247 = vmul.f32 %v245, %v217
        %v248 = vmul.f32 %v246, %v218
        %v249 = vsel %vm210, %v247, 0.0
        %250 = vadd.xlane.f32.xlu0 %v249
        %v251 = vpop.xlane.xlu0 %250
        %v252 = vsel %vm210, %v248, 0.0
        %253 = vadd.xlane.f32.xlu0 %v252
        %v254 = vpop.xlane.xlu0 %253
        %v255 = vsub.f32 %v251, %v230
        %v256 = vsub.f32 %v254, %v232
        %v257 = vmul.f32 %v255, 1.442695
        %v258 = vpow.pop %v257
        %v259 = vmul.f32 %v256, 1.442695
        %v260 = vpow.pop %v259
        %v261 = vsub.f32 1.0, %v258
        %v262 = vsub.f32 1.0, %v260
        %v263 = vmax.f32 %v261, 0.0
        %v264 = vmax.f32 %v262, 0.0
        %v265 = vmul.f32 %v263, %v263
        %v266 = vmul.f32 %v264, %v264
        %v267 = vmul.f32 %v265, -1.0
        %v268 = vmul.f32 %v266, -1.0
        %v269 = vmul.f32 %v267, %v255
        %v270 = vmul.f32 %v268, %v256
        %v271 = vlaneseq
        %v272 = vshrl.u32 %v271, 7
        %v273 = vadd.s32 %v272, 8
        %s274 = smul.u32 %s16, 16
        %v275 = vstv %s274
        %v276 = vadd.s32 %v272, %v275
        %v277 = vadd.s32 %v273, %v275
        %vm278 = vcmp.lt.s32.totalorder %v276, 37
        %vm279 = vcmp.lt.s32.totalorder %v277, 37
        %v280 = vsel %vm278, %v269, 0.0
        %v281 = vsel %vm279, %v270, 0.0
        %vm282 = vcmask 7168
        %v283 = vsel %vm282, %v280, 0.0
        %v284 = vsel %vm282, %v281, 0.0
        %v285 = vadd.f32 %v283, %v284
        %286 = vadd.xlane.f32.xlu0 %v285
        %v287 = vpop.xlane.xlu0 %286
        %v288 = vrot.slane %v287, 4
        %v289 = vadd.f32 %v287, %v288
        %v290 = vrot.slane %v289, 2
        %v291 = vadd.f32 %v289, %v290
        %v292 = vrot.slane %v291, 1
        %v293 = vadd.f32 %v291, %v292
        %s294 = vtos %v293
        %v295 = vstv %s294
        %296 = vst [vmem:[%s177] sm:$0xff] %v295
        %s297 = sand.u32 %s76, 1
        %s298 = scalar_lea.sflag [#allocation3], %s297
        %s299 = sand.u32 %s76, 1
        %s300 = smul.addr %s299, 8
        %s301 = scalar_lea.vmem [#allocation2], %s300
        // Predicated region
        $region29: #{tpu_custom_call.1} parent=27 // pred_check
          %p302 = pneg %p86
        $region30: #{tpu_custom_call.1} parent=27 // pred_check_branch
          %304 = sbr.rel (%p302) target = $region32
        $region31: #{tpu_custom_call.1} parent=27 // pred_region
          %s306 = ssub.s32 128, 128
          %307 = vsyncadd %s298, %s306
          %s308 = smul.addr %s16, 128
          %s309 = scalar_lea.hbm %s2, %s308
          %s311 = sshll.u32 %s301, 4
          %s312 = int_to_ptr.vmem [resolvable:$true] %s311
          %314 = dma.vmem_to_hbm [thread:$0]  %s312, 128, %s309, %s298
        $region32: #{tpu_custom_call.1} parent=27 // pred_fallthru
          _
      $region28: #{tpu_custom_call.1} parent=5 // pred_fallthru
        _
      %p315 = scmp.le.s32.totalorder 2, %s11
      // Predicated region
      $region33: #{tpu_custom_call.1} parent=5 // pred_check
        %p316 = pneg %p315
      $region34: #{tpu_custom_call.1} parent=5 // pred_check_branch
        %318 = sbr.rel (%p316) target = $region36
      $region35: #{tpu_custom_call.1} parent=5 // pred_region
        %s319 = ssub.s32 %s11, 2
        // Predicated region
        $region37: #{tpu_custom_call.1} parent=35 // pred_check
          %p320 = pneg %p92
        $region38: #{tpu_custom_call.1} parent=35 // pred_check_branch
          %322 = sbr.rel (%p320) target = $region40
        $region39: #{tpu_custom_call.1} parent=35 // pred_region
          %s323 = sand.u32 %s77, 1
          %s324 = scalar_lea.sflag [#allocation3], %s323
          %s325 = sand.u32 %s77, 1
          %s326 = smul.addr %s325, 8
          %s327 = scalar_lea.vmem [#allocation2], %s326
          %328 = dma.done %s324, 128
        $region40: #{tpu_custom_call.1} parent=35 // pred_fallthru
          _
      $region36: #{tpu_custom_call.1} parent=5 // pred_fallthru
        _
    $region6: #{tpu_custom_call.1} parent=1 // loop_footer
      %s15 = sadd.s32 1, %s11
    $region7: #{tpu_custom_call.1} parent=1 // loop_footer_branch
      %10 = sbr.rel target = $region3
    $region8: #{tpu_custom_call.1} parent=1 // loop_exit
      _
    %329 = vsyncpa [#allocation3], 1
    %s330 = scalar_lea.sflag [#allocation3], 1
    %331 = vsyncpa %s330, 1

</llo_original>
